<compile_context>
chip_gen: v7x
topology: tpu7x:2x2x1
jax: 0.10.0
libtpu: 0.0.40
codegen_flags: <defaults>
</compile_context>

<pallas_src>
import functools

import jax
import jax.numpy as jnp
from jax import lax
from jax.experimental import pallas as pl
from jax.experimental.pallas import tpu as pltpu

EPS = 1e-5

# Per-buffer block budget in elements (~1 MiB f32): near the measured HBM roofline
# sweet spot and safely double-bufferable within scoped VMEM on v5e/v6e/v7x.
_BLOCK_ELEMS = 256 * 1024
_VMEM_LIMIT = 32 * 1024 * 1024


# ---------------------------------------------------------------------------
# Tiling helpers
# ---------------------------------------------------------------------------
def _pick_channel_tile(c_len, c_start, c_full, hw, budget_elems):
    """Channel (sublane) tile for blocks covering channels [c_start, c_start+c_len)
    of an array with c_full channels.  A valid tile t must divide c_len, have
    c_start % t == 0 (offset is a whole number of blocks), and satisfy the TPU
    sublane rule (t % 8 == 0, or the block spans the array's full channel extent).
    Returns None if impossible (caller slices the channel range out first)."""
    cands = [t for t in range(8, c_len + 1, 8)
             if c_len % t == 0 and c_start % t == 0]
    if c_start == 0 and c_len == c_full:
        cands.append(c_len)
    if not cands:
        return None
    within = [t for t in cands if t * hw <= budget_elems]
    return max(within) if within else min(cands)


def _pick_batch_tile(n, per_n_elems, budget_elems):
    best = 1
    for t in range(1, n + 1):
        if n % t == 0 and t * per_n_elems <= budget_elems:
            best = t
    return best


def _channel_view(x, c_start, c_len, hw):
    """Return (array, channel_tile, channel_block_offset) for operating on channels
    [c_start, c_start+c_len).  Prefers a zero-copy view of the full array via an
    index_map block offset; falls back to an XLA slice when alignment forbids it."""
    c_full = x.shape[1]
    tile = _pick_channel_tile(c_len, c_start, c_full, hw, _BLOCK_ELEMS)
    if tile is not None:
        return x, tile, c_start // tile
    x_slice = x[:, c_start:c_start + c_len, :]
    tile = _pick_channel_tile(c_len, 0, c_len, hw, _BLOCK_ELEMS)
    return x_slice, tile, 0


# ---------------------------------------------------------------------------
# Kernels
# ---------------------------------------------------------------------------
def _instance_norm_kernel(x_ref, g_ref, b_ref, o_ref, *, inv_hw):
    # x_ref: (n_t, c_t, HW); g/b: (1, c_t, 1).  Per-(n, c) stats over HW (lane
    # reduction), folded into one scale/shift so normalization is one FMA/element.
    x = x_ref[...].astype(jnp.float32)
    s = jnp.sum(x, axis=-1, keepdims=True)
    ss = jnp.sum(x * x, axis=-1, keepdims=True)
    mu = s * inv_hw
    var = ss * inv_hw - mu * mu
    scale = g_ref[...] * lax.rsqrt(var + EPS)          # (n_t, c_t, 1)
    shift = b_ref[...] - mu * scale
    o_ref[...] = (x * scale + shift).astype(o_ref.dtype)


def _bn_stats_kernel(x_ref, sum_ref, ssq_ref):
    # grid = (channel blocks [parallel], batch blocks [arbitrary / reduction]).
    # sum_ref / ssq_ref: (c_t, 1) f32 accumulators resident across the batch axis.
    @pl.when(pl.program_id(1) == 0)
    def _():
        sum_ref[...] = jnp.zeros_like(sum_ref)
        ssq_ref[...] = jnp.zeros_like(ssq_ref)

    x = x_ref[...].astype(jnp.float32)
    sum_ref[...] += jnp.sum(jnp.sum(x, axis=-1, keepdims=True), axis=0)
    ssq_ref[...] += jnp.sum(jnp.sum(x * x, axis=-1, keepdims=True), axis=0)


def _scale_shift_kernel(x_ref, scale_ref, shift_ref, o_ref):
    # One FMA per element with pre-folded per-channel scale/shift.
    x = x_ref[...].astype(jnp.float32)
    o_ref[...] = (x * scale_ref[...] + shift_ref[...]).astype(o_ref.dtype)


# ---------------------------------------------------------------------------
# Per-half drivers
# ---------------------------------------------------------------------------
def _instance_norm_half(x, c_start, c_len, gamma, beta):
    N, _, HW = x.shape
    dtype = x.dtype
    x_view, c_tile, c_off = _channel_view(x, c_start, c_len, HW)
    n_tile = _pick_batch_tile(N, c_tile * HW, _BLOCK_ELEMS)
    itemsize = jnp.dtype(dtype).itemsize

    g = gamma.reshape(1, c_len, 1).astype(jnp.float32)
    b = beta.reshape(1, c_len, 1).astype(jnp.float32)

    cost = pl.CostEstimate(
        flops=8 * N * c_len * HW,
        transcendentals=N * c_len,
        bytes_accessed=2 * N * c_len * HW * itemsize + 8 * c_len,
    )

    return pl.pallas_call(
        functools.partial(_instance_norm_kernel, inv_hw=1.0 / HW),
        out_shape=jax.ShapeDtypeStruct((N, c_len, HW), dtype),
        grid=(N // n_tile, c_len // c_tile),
        in_specs=[
            pl.BlockSpec((n_tile, c_tile, HW), lambda i, j: (i, j + c_off, 0)),
            pl.BlockSpec((1, c_tile, 1), lambda i, j: (0, j, 0)),
            pl.BlockSpec((1, c_tile, 1), lambda i, j: (0, j, 0)),
        ],
        out_specs=pl.BlockSpec((n_tile, c_tile, HW), lambda i, j: (i, j, 0)),
        compiler_params=pltpu.CompilerParams(
            dimension_semantics=("parallel", "parallel"),
            vmem_limit_bytes=_VMEM_LIMIT,
        ),
        cost_estimate=cost,
    )(x_view, g, b)


def _batch_norm_half(x, c_start, c_len, gamma, beta):
    N, _, HW = x.shape
    dtype = x.dtype
    x_view, c_tile, c_off = _channel_view(x, c_start, c_len, HW)
    n_tile = _pick_batch_tile(N, c_tile * HW, _BLOCK_ELEMS)
    itemsize = jnp.dtype(dtype).itemsize

    # ---- pass 1: per-channel sum / sum-of-squares over (N, H*W) ----
    stats_cost = pl.CostEstimate(
        flops=3 * N * c_len * HW,
        transcendentals=0,
        bytes_accessed=N * c_len * HW * itemsize + 8 * c_len,
    )
    sums, ssqs = pl.pallas_call(
        _bn_stats_kernel,
        out_shape=(jax.ShapeDtypeStruct((c_len, 1), jnp.float32),
                   jax.ShapeDtypeStruct((c_len, 1), jnp.float32)),
        grid=(c_len // c_tile, N // n_tile),
        in_specs=[
            pl.BlockSpec((n_tile, c_tile, HW), lambda j, n: (n, j + c_off, 0)),
        ],
        out_specs=(pl.BlockSpec((c_tile, 1), lambda j, n: (j, 0)),
                   pl.BlockSpec((c_tile, 1), lambda j, n: (j, 0))),
        compiler_params=pltpu.CompilerParams(
            dimension_semantics=("parallel", "arbitrary"),
            vmem_limit_bytes=_VMEM_LIMIT,
        ),
        cost_estimate=stats_cost,
    )(x_view)

    # Fold batch statistics + affine into per-channel scale/shift (O(C), plain XLA).
    cnt = jnp.float32(N * HW)
    mu = sums[:, 0] / cnt
    var = jnp.maximum(ssqs[:, 0] / cnt - mu * mu, 0.0)   # biased (training) variance
    scale = gamma.astype(jnp.float32) * lax.rsqrt(var + EPS)
    shift = beta.astype(jnp.float32) - mu * scale
    scale = scale.reshape(1, c_len, 1)
    shift = shift.reshape(1, c_len, 1)
    # TODO(synk): BatchNorm2d's running_mean/running_var buffer updates (module state,
    # unbiased variance, momentum) are not reproduced — only the normalized output is.

    # ---- pass 2: stream x again, apply y = x*scale + shift ----
    apply_cost = pl.CostEstimate(
        flops=2 * N * c_len * HW,
        transcendentals=0,
        bytes_accessed=2 * N * c_len * HW * itemsize + 8 * c_len,
    )
    return pl.pallas_call(
        _scale_shift_kernel,
        out_shape=jax.ShapeDtypeStruct((N, c_len, HW), dtype),
        grid=(N // n_tile, c_len // c_tile),
        in_specs=[
            pl.BlockSpec((n_tile, c_tile, HW), lambda i, j: (i, j + c_off, 0)),
            pl.BlockSpec((1, c_tile, 1), lambda i, j: (0, j, 0)),
            pl.BlockSpec((1, c_tile, 1), lambda i, j: (0, j, 0)),
        ],
        out_specs=pl.BlockSpec((n_tile, c_tile, HW), lambda i, j: (i, j, 0)),
        compiler_params=pltpu.CompilerParams(
            dimension_semantics=("parallel", "parallel"),
            vmem_limit_bytes=_VMEM_LIMIT,
        ),
        cost_estimate=apply_cost,
    )(x_view, scale, shift)


# ---------------------------------------------------------------------------
# Public entry point
# ---------------------------------------------------------------------------
def ibn_forward(x_nchw, in_gamma, in_beta, bn_gamma, bn_beta, *, ratio=0.5):
    """IBN forward (training-mode statistics).  x_nchw: (N, C, H, W) -> (N, C, H, W)."""
    N, C, H, W = x_nchw.shape
    half = int(C * ratio)
    HW = H * W
    # Keep the input dtype end-to-end; kernels upcast to f32 internally for the math.
    x = x_nchw.reshape(N, C, HW)

    parts = []
    if half > 0:
        parts.append(_instance_norm_half(x, 0, half, in_gamma, in_beta))
    if C - half > 0:
        parts.append(_batch_norm_half(x, half, C - half, bn_gamma, bn_beta))
    out = parts[0] if len(parts) == 1 else jnp.concatenate(parts, axis=1)
    return out.reshape(N, C, H, W)


# ---------------------------------------------------------------------------
# Pure-JAX reference for correctness check
# ---------------------------------------------------------------------------
def _ibn_reference(x_nchw, in_gamma, in_beta, bn_gamma, bn_beta, *, ratio=0.5):
    N, C, H, W = x_nchw.shape
    half = int(C * ratio)
    x = x_nchw.astype(jnp.float32)
    x_in, x_bn = x[:, :half], x[:, half:]

    mu_i = jnp.mean(x_in, axis=(2, 3), keepdims=True)
    var_i = jnp.var(x_in, axis=(2, 3), keepdims=True)
    o_in = (x_in - mu_i) / jnp.sqrt(var_i + EPS)
    o_in = o_in * in_gamma.reshape(1, half, 1, 1) + in_beta.reshape(1, half, 1, 1)

    mu_b = jnp.mean(x_bn, axis=(0, 2, 3), keepdims=True)
    var_b = jnp.var(x_bn, axis=(0, 2, 3), keepdims=True)
    o_bn = (x_bn - mu_b) / jnp.sqrt(var_b + EPS)
    o_bn = o_bn * bn_gamma.reshape(1, C - half, 1, 1) + bn_beta.reshape(1, C - half, 1, 1)

    return jnp.concatenate([o_in, o_bn], axis=1)


if __name__ == "__main__":
    def _check(N, C, H, W, ratio=0.5):
        half = int(C * ratio)
        key = jax.random.PRNGKey(0)
        kx, k1, k2, k3, k4 = jax.random.split(key, 5)
        x = jax.random.normal(kx, (N, C, H, W), dtype=jnp.float32)
        in_gamma = 1.0 + 0.1 * jax.random.normal(k1, (half,), dtype=jnp.float32)
        in_beta = 0.1 * jax.random.normal(k2, (half,), dtype=jnp.float32)
        bn_gamma = 1.0 + 0.1 * jax.random.normal(k3, (C - half,), dtype=jnp.float32)
        bn_beta = 0.1 * jax.random.normal(k4, (C - half,), dtype=jnp.float32)

        out = jax.block_until_ready(
            ibn_forward(x, in_gamma, in_beta, bn_gamma, bn_beta, ratio=ratio))
        ref = _ibn_reference(x, in_gamma, in_beta, bn_gamma, bn_beta, ratio=ratio)
        assert out.shape == (N, C, H, W)
        err = float(jnp.max(jnp.abs(out - ref)))
        assert err < 1e-3, f"Pallas IBN mismatch vs reference: max abs err {err}"

    # Tiny shape from the spec (unaligned channel split -> XLA-slice fallback path).
    _check(2, 4, 16, 16)
    # 8-aligned channel split -> zero-copy index_map-offset path (production-like).
    _check(2, 16, 16, 16)

    print("KERNEL_OK")
</pallas_src>

<mosaic_0001>
module attributes {stable_mosaic.version = 11 : i64} {
  func.func @_instance_norm_kernel(%arg0: i32, %arg1: i32, %arg2: memref<2x2x256xf32, #tpu.memory_space<vmem>>, %arg3: memref<1x2x1xf32, #tpu.memory_space<vmem>>, %arg4: memref<1x2x1xf32, #tpu.memory_space<vmem>>, %arg5: memref<2x2x256xf32, #tpu.memory_space<vmem>>) attributes {dimension_semantics = [#tpu.dimension_semantics<parallel>, #tpu.dimension_semantics<parallel>], iteration_bounds = array<i64: 1, 1>, scalar_prefetch = 0 : i64, scratch_operands = 0 : i64, tpu.core_type = #tpu.core_type<tc>, window_params = [{transform_indices = @transform_0, window_bounds = array<i64: 2, 2, 256>}, {transform_indices = @transform_1, window_bounds = array<i64: 1, 2, 1>}, {transform_indices = @transform_2, window_bounds = array<i64: 1, 2, 1>}, {transform_indices = @transform_3, window_bounds = array<i64: 2, 2, 256>}]} {
    %c0 = arith.constant 0 : index
    %c0_0 = arith.constant 0 : index
    %c0_1 = arith.constant 0 : index
    %0 = vector.load %arg2[%c0, %c0_0, %c0_1] : memref<2x2x256xf32, #tpu.memory_space<vmem>>, vector<2x2x256xf32>
    %cst = arith.constant dense<0.000000e+00> : vector<2x2xf32>
    %1 = vector.multi_reduction <add>, %0, %cst [2] : vector<2x2x256xf32> to vector<2x2xf32>
    %2 = vector.shape_cast %1 : vector<2x2xf32> to vector<2x2x1xf32>
    %3 = arith.mulf %0, %0 : vector<2x2x256xf32>
    %cst_2 = arith.constant dense<0.000000e+00> : vector<2x2xf32>
    %4 = vector.multi_reduction <add>, %3, %cst_2 [2] : vector<2x2x256xf32> to vector<2x2xf32>
    %5 = vector.shape_cast %4 : vector<2x2xf32> to vector<2x2x1xf32>
    %cst_3 = arith.constant 3.906250e-03 : f32
    %6 = vector.broadcast %cst_3 : f32 to vector<2x2x1xf32>
    %7 = arith.mulf %2, %6 : vector<2x2x1xf32>
    %cst_4 = arith.constant 3.906250e-03 : f32
    %8 = vector.broadcast %cst_4 : f32 to vector<2x2x1xf32>
    %9 = arith.mulf %5, %8 : vector<2x2x1xf32>
    %10 = arith.mulf %7, %7 : vector<2x2x1xf32>
    %11 = arith.subf %9, %10 : vector<2x2x1xf32>
    %c0_5 = arith.constant 0 : index
    %c0_6 = arith.constant 0 : index
    %c0_7 = arith.constant 0 : index
    %12 = vector.load %arg3[%c0_5, %c0_6, %c0_7] : memref<1x2x1xf32, #tpu.memory_space<vmem>>, vector<1x2x1xf32>
    %cst_8 = arith.constant 9.99999974E-6 : f32
    %13 = vector.broadcast %cst_8 : f32 to vector<2x2x1xf32>
    %14 = arith.addf %11, %13 : vector<2x2x1xf32>
    %15 = math.rsqrt %14 : vector<2x2x1xf32>
    %16 = vector.broadcast %12 : vector<1x2x1xf32> to vector<2x2x1xf32>
    %17 = arith.mulf %16, %15 : vector<2x2x1xf32>
    %c0_9 = arith.constant 0 : index
    %c0_10 = arith.constant 0 : index
    %c0_11 = arith.constant 0 : index
    %18 = vector.load %arg4[%c0_9, %c0_10, %c0_11] : memref<1x2x1xf32, #tpu.memory_space<vmem>>, vector<1x2x1xf32>
    %19 = arith.mulf %7, %17 : vector<2x2x1xf32>
    %20 = vector.broadcast %18 : vector<1x2x1xf32> to vector<2x2x1xf32>
    %21 = arith.subf %20, %19 : vector<2x2x1xf32>
    %22 = vector.broadcast %17 : vector<2x2x1xf32> to vector<2x2x256xf32>
    %23 = arith.mulf %0, %22 : vector<2x2x256xf32>
    %24 = vector.broadcast %21 : vector<2x2x1xf32> to vector<2x2x256xf32>
    %25 = arith.addf %23, %24 : vector<2x2x256xf32>
    %c0_12 = arith.constant 0 : index
    %c0_13 = arith.constant 0 : index
    %c0_14 = arith.constant 0 : index
    %26 = vector.load %arg5[%c0_12, %c0_13, %c0_14] : memref<2x2x256xf32, #tpu.memory_space<vmem>>, vector<2x2x256xf32>
    tpu.vector_store %arg5[%c0_12, %c0_13, %c0_14], %25 {strides = array<i32>} : memref<2x2x256xf32, #tpu.memory_space<vmem>>, vector<2x2x256xf32>,
    return
  }
  func.func @transform_0(%arg0: i32, %arg1: i32) -> (i32, i32, i32) {
    %c0_i32 = arith.constant 0 : i32
    %0 = arith.addi %arg1, %c0_i32 : i32
    %c0_i32_0 = arith.constant 0 : i32
    %c0_i32_1 = arith.constant 0 : i32
    return %arg0, %0, %c0_i32_0 : i32, i32, i32
  }
  func.func @transform_1(%arg0: i32, %arg1: i32) -> (i32, i32, i32) {
    %c0_i32 = arith.constant 0 : i32
    %c0_i32_0 = arith.constant 0 : i32
    %c0_i32_1 = arith.constant 0 : i32
    return %c0_i32, %arg1, %c0_i32_0 : i32, i32, i32
  }
  func.func @transform_2(%arg0: i32, %arg1: i32) -> (i32, i32, i32) {
    %c0_i32 = arith.constant 0 : i32
    %c0_i32_0 = arith.constant 0 : i32
    %c0_i32_1 = arith.constant 0 : i32
    return %c0_i32, %arg1, %c0_i32_0 : i32, i32, i32
  }
  func.func @transform_3(%arg0: i32, %arg1: i32) -> (i32, i32, i32) {
    %c0_i32 = arith.constant 0 : i32
    %c0_i32_0 = arith.constant 0 : i32
    return %arg0, %arg1, %c0_i32 : i32, i32, i32
  }
}

</mosaic_0001>

<llo_original>
// kernel: tpu_custom_call.1
$region0: #{tpu_custom_call.1}
  #allocation0 [shape = 'u32[]', space=smem, size = 0x4, offset = 0x4, fixed_abs, tag = 'smem constant byte address 0x4 - core index']
  #allocation1 [shape = 'u32[144,128]{1,0:T(1,128)}', space=vmem, size = 0x12000, scoped, tag = 'internal scratch']
  %s0 = inlined_call_operand.hbm [shape: f32[2,2,256], index: 0, kind: input, shape index: {}]
  %s1 = inlined_call_operand.vmem [shape: f32[1,2,1], index: 1, kind: input, shape index: {}]
  %s2 = inlined_call_operand.vmem [shape: f32[1,2,1], index: 2, kind: input, shape index: {}]
  %s3 = inlined_call_operand.hbm [shape: f32[2,2,256], index: 3, kind: output, shape index: {}]
  %s4 = sld [smem:[#allocation0]]
  $region26: #{tpu_custom_call.1} parent=0
    _
  %s6 = ssub.s32 1, %s4
  %s7 = scalar_select 0, %s6, %s4
  $region1: #{tpu_custom_call.1} parent=0
    #allocation2 [shape = 'u8[4096]{0}', space=vmem, size = 0x1000, scoped, tag = 'input window, operand 0, single buffered']
    #allocation3 [shape = 's32[1]{0}', space=sflag, size = 0x4, scoped, tag = 'scoped memory for tpu_custom_call.1']
    #allocation4 [shape = 's32[1]{0}', space=sflag, size = 0x4, scoped, tag = 'scoped memory for tpu_custom_call.1']
    #allocation5 [shape = 'u8[4096]{0}', space=vmem, size = 0x1000, scoped, tag = 'output window, operand 0, single buffered']
    %8 = vsyncpa [#allocation3], 0
    %9 = vsyncpa [#allocation4], 0
    // Predicated region
    $region2: #{tpu_custom_call.1} parent=1 // pred_check
      _
    $region3: #{tpu_custom_call.1} parent=1 // pred_check_branch
      %11 = sbr.rel (0) target = $region5
    $region4: #{tpu_custom_call.1} parent=1 // pred_region
      %s13 = ssub.s32 128, 128
      %14 = vsyncadd [#allocation3], %s13
      %s15 = sshll.u32 [#allocation2], 4
      %s16 = int_to_ptr.vmem [resolvable:$true] %s15
      %21 = dma.hbm_to_vmem [thread:$0]  %s0, 128, %s16, [#allocation3], 64, 64, 4
    $region5: #{tpu_custom_call.1} parent=1 // pred_fallthru
      _
    // Predicated region
    $region6: #{tpu_custom_call.1} parent=1 // pred_check
      _
    $region7: #{tpu_custom_call.1} parent=1 // pred_check_branch
      %23 = sbr.rel (0) target = $region9
    $region8: #{tpu_custom_call.1} parent=1 // pred_region
      _
    $region9: #{tpu_custom_call.1} parent=1 // pred_fallthru
      _
    // Predicated region
    $region10: #{tpu_custom_call.1} parent=1 // pred_check
      _
    $region11: #{tpu_custom_call.1} parent=1 // pred_check_branch
      %25 = sbr.rel (0) target = $region13
    $region12: #{tpu_custom_call.1} parent=1 // pred_region
      _
    $region13: #{tpu_custom_call.1} parent=1 // pred_fallthru
      _
    // Predicated region
    $region14: #{tpu_custom_call.1} parent=1 // pred_check
      _
    $region15: #{tpu_custom_call.1} parent=1 // pred_check_branch
      %27 = sbr.rel (0) target = $region17
    $region16: #{tpu_custom_call.1} parent=1 // pred_region
      %28 = dma.done [#allocation3], 128
    $region17: #{tpu_custom_call.1} parent=1 // pred_fallthru
      _
    %v29 = vld [vmem:[#allocation2] sm:$0xf]
    %v30 = vld [vmem:[#allocation2 + $0x4] sm:$0xf]
    %v34 = vunpack.c.l.s4 1983009808
    %v35 = vunpack.c.0.s8 %v34
    %v36 = vlaneseq
    %v37 = vshrl.u32 %v36, 7
    %v38 = vsub.s32 %v35, %v37
    %v39 = vrot.slane %v29, %v38
    %v40 = vcombine.high %v39, %v39
    %v42 = vunpack.c.l.s4 1983009808
    %v43 = vunpack.c.0.s8 %v42
    %v44 = vlaneseq
    %v45 = vshrl.u32 %v44, 7
    %v46 = vsub.s32 %v43, %v45
    %v47 = vrot.slane %v30, %v46
    %v48 = vcombine.high %v47, %v47
    %vm53 = vcmask 1041408
    %v54 = vsel %vm53, %v39, 0.0
    %v55 = vsel %vm53, %v40, 0.0
    %v56 = vadd.f32 %v54, %v55
    %57 = vadd.xlane.f32.xlu0 %v56
    %v58 = vpop.xlane.xlu0 %57
    %v59 = vsel %vm53, %v47, 0.0
    %v60 = vsel %vm53, %v48, 0.0
    %v61 = vadd.f32 %v59, %v60
    %62 = vadd.xlane.f32.xlu0 %v61
    %v63 = vpop.xlane.xlu0 %62
    %v64 = vmul.f32 %v29, %v29
    %v65 = vmul.f32 %v30, %v30
    %v69 = vunpack.c.l.s4 1983009808
    %v70 = vunpack.c.0.s8 %v69
    %v71 = vlaneseq
    %v72 = vshrl.u32 %v71, 7
    %v73 = vsub.s32 %v70, %v72
    %v74 = vrot.slane %v64, %v73
    %v75 = vcombine.high %v74, %v74
    %v77 = vunpack.c.l.s4 1983009808
    %v78 = vunpack.c.0.s8 %v77
    %v79 = vlaneseq
    %v80 = vshrl.u32 %v79, 7
    %v81 = vsub.s32 %v78, %v80
    %v82 = vrot.slane %v65, %v81
    %v83 = vcombine.high %v82, %v82
    %v88 = vsel %vm53, %v74, 0.0
    %v89 = vsel %vm53, %v75, 0.0
    %v90 = vadd.f32 %v88, %v89
    %91 = vadd.xlane.f32.xlu0 %v90
    %v92 = vpop.xlane.xlu0 %91
    %v93 = vsel %vm53, %v82, 0.0
    %v94 = vsel %vm53, %v83, 0.0
    %v95 = vadd.f32 %v93, %v94
    %96 = vadd.xlane.f32.xlu0 %v95
    %v97 = vpop.xlane.xlu0 %96
    %v98 = vmul.f32 %v58, 0.00390625
    %v99 = vmul.f32 %v63, 0.00390625
    %v100 = vmul.f32 %v92, 0.00390625
    %v101 = vmul.f32 %v97, 0.00390625
    %v102 = vmul.f32 %v98, %v98
    %v103 = vmul.f32 %v99, %v99
    %v104 = vsub.f32 %v100, %v102
    %v105 = vsub.f32 %v101, %v103
    %v106 = vld [vmem:[%s1] sm:$0x3]
    %v107 = vadd.f32 %v104, 1e-05
    %v108 = vadd.f32 %v105, 1e-05
    %v109 = vrsqrt.pop %v107
    %v110 = vrsqrt.pop %v108
    %v111 = vmul.f32 %v106, %v109
    %v112 = vmul.f32 %v106, %v110
    %v113 = vld [vmem:[%s2] sm:$0x3]
    %v114 = vmul.f32 %v98, %v111
    %v115 = vmul.f32 %v99, %v112
    %v116 = vsub.f32 %v113, %v114
    %v117 = vsub.f32 %v113, %v115
    %119 = vset.pattern.permute.xlu0 0
    %120 = vperm.xlu0 %119, %v111
    %v121 = vpop.permute.xlu0 %120
    %123 = vset.pattern.permute.xlu0 0
    %124 = vperm.xlu0 %123, %v112
    %v125 = vpop.permute.xlu0 %124
    %v127 = vunpack.c.l.s4 269488144
    %v128 = vunpack.c.0.s8 %v127
    %v129 = vlaneseq
    %v130 = vshrl.u32 %v129, 7
    %v131 = vsub.s32 %v128, %v130
    %v132 = vrot.slane %v121, %v131
    %v134 = vunpack.c.l.s4 269488144
    %v135 = vunpack.c.0.s8 %v134
    %v136 = vlaneseq
    %v137 = vshrl.u32 %v136, 7
    %v138 = vsub.s32 %v135, %v137
    %v139 = vrot.slane %v125, %v138
    %v142 = vmul.f32 %v29, %v132
    %v143 = vmul.f32 %v30, %v139
    %145 = vset.pattern.permute.xlu0 0
    %146 = vperm.xlu0 %145, %v116
    %v147 = vpop.permute.xlu0 %146
    %149 = vset.pattern.permute.xlu0 0
    %150 = vperm.xlu0 %149, %v117
    %v151 = vpop.permute.xlu0 %150
    %v153 = vunpack.c.l.s4 269488144
    %v154 = vunpack.c.0.s8 %v153
    %v155 = vlaneseq
    %v156 = vshrl.u32 %v155, 7
    %v157 = vsub.s32 %v154, %v156
    %v158 = vrot.slane %v147, %v157
    %v160 = vunpack.c.l.s4 269488144
    %v161 = vunpack.c.0.s8 %v160
    %v162 = vlaneseq
    %v163 = vshrl.u32 %v162, 7
    %v164 = vsub.s32 %v161, %v163
    %v165 = vrot.slane %v151, %v164
    %v168 = vadd.f32 %v142, %v158
    %v169 = vadd.f32 %v143, %v165
    %170 = vst [vmem:[#allocation5] sm:$0xf] %v168
    %171 = vst [vmem:[#allocation5 + $0x4] sm:$0xf] %v169
    // Predicated region
    $region18: #{tpu_custom_call.1} parent=1 // pred_check
      _
    $region19: #{tpu_custom_call.1} parent=1 // pred_check_branch
      %173 = sbr.rel (0) target = $region21
    $region20: #{tpu_custom_call.1} parent=1 // pred_region
      %s175 = ssub.s32 128, 128
      %176 = vsyncadd [#allocation4], %s175
      %s177 = sshll.u32 [#allocation5], 4
      %s178 = int_to_ptr.vmem [resolvable:$true] %s177
      %183 = dma.vmem_to_hbm [thread:$0]  %s178, 128, %s3, [#allocation4], 64, 64, 4
    $region21: #{tpu_custom_call.1} parent=1 // pred_fallthru
      _
    // Predicated region
    $region22: #{tpu_custom_call.1} parent=1 // pred_check
      _
    $region23: #{tpu_custom_call.1} parent=1 // pred_check_branch
      %185 = sbr.rel (0) target = $region25
    $region24: #{tpu_custom_call.1} parent=1 // pred_region
      %186 = dma.done [#allocation4], 128
    $region25: #{tpu_custom_call.1} parent=1 // pred_fallthru
      _
    %187 = vsyncpa [#allocation3], 1
    %188 = vsyncpa [#allocation4], 1

</llo_original>
